<compile_context>
chip_gen: v7x
topology: tpu7x:2x2x1
jax: 0.10.0
libtpu: 0.0.40
codegen_flags: <defaults>
</compile_context>

<pallas_src>
import jax
import jax.numpy as jnp
from jax import lax
from jax.experimental import pallas as pl
from jax.experimental.pallas import tpu as pltpu
import numpy as np

# Model hyper-parameters implied by the module (state_size=(8,8), hidden_dim=5,
# action_dim=4, batch_size=1).
S = 8                      # state_size[0] (square spatial input)
CIN = 4                    # in_channels
NF = 16                    # num_filters
KS = 2                     # filter_size (conv kernel AND pool kernel)
HOUT = S - KS + 1          # conv output spatial = 7
HPOOL = S - KS             # pool output spatial = 6
HIDDEN = 5
ACTION_DIM = 4
EPS = 1e-5                 # BatchNorm2d default eps
NEG_SLOPE = 0.01           # LeakyReLU default negative_slope

NPATCH = KS * KS * CIN     # 16 im2col columns (t*CIN + c)
NPOS = S * S               # 64 conv positions (row q = h*S + w, padded grid)

# Packed-slab plane / row indices (slab shape: (HIDDEN + 2, NPOS, NF)).
P_W1 = 0                   # planes [0, HIDDEN): permuted Linear1 weights
P_CONV = HIDDEN            # plane 5: im2col conv weight + BN shift
P_HEAD = HIDDEN + 1        # plane 6: b1 / w2^T / b2
R_SHIFT = NPATCH           # row 16 of the conv plane   (sublane-aligned)
R_B1 = 0                   # rows 0:5  of the head plane
R_W2 = 8                   # rows 8:13 of the head plane (sublane-aligned)
R_B2 = 16                  # row 16    of the head plane (sublane-aligned)


def fused_forward_kernel(x_ref, slab_ref, out_ref):
    # ---- Conv2d + BatchNorm(eval) as ONE MXU matmul. ------------------------
    # x_ref is the (64,16) im2col patch matrix (row q = h*S+w, col t*CIN+c).
    # BN scale is folded into wcat; conv bias + BN shift folded into `shift`.
    conv_plane = slab_ref[P_CONV]                          # (64, 16)
    wcat = conv_plane[0:NPATCH, :]                         # (16, 16) aligned slice
    shift = conv_plane[R_SHIFT:R_SHIFT + 1, :]             # (1, 16)  aligned slice
    y = jnp.dot(x_ref[...], wcat, preferred_element_type=jnp.float32) + shift
    y = jnp.where(y > 0, y, NEG_SLOPE * y)                 # LeakyReLU, (64, 16)

    # ---- MaxPool2d(k=2, s=1) on live vregs via two XLU sublane rotations. ---
    # pltpu.roll(v, NPOS - k, axis=0) == np.roll(v, -k): row q picks up row
    # q + k.  Valid pooled rows (h,w < 6) never wrap; wrapped / out-of-window
    # rows are finite garbage and are zero-weighted in the packed w1 planes.
    m01 = jnp.maximum(y, pltpu.roll(y, shift=NPOS - 1, axis=0))
    pooled = jnp.maximum(m01, pltpu.roll(m01, shift=NPOS - S, axis=0))  # (64,16)

    # ---- Linear(576->5): 5 independent multiply+reduce passes (no shared
    #      accumulator -> the reductions pipeline through the XLU), then
    #      ReLU + the tiny Linear(5->4) once. Dropout(0.1) is eval-identity. --
    parts = [jnp.sum(pooled * slab_ref[P_W1 + i], axis=0, keepdims=True)  # (1,16)
             for i in range(HIDDEN)]
    pre = jnp.sum(jnp.concatenate(parts, axis=0), axis=1, keepdims=True)  # (5,1)

    head = slab_ref[P_HEAD]                                # (64, 16)
    b1 = head[R_B1:R_B1 + HIDDEN, 0:1]                     # (5, 1)
    w2t = head[R_W2:R_W2 + HIDDEN, 0:ACTION_DIM]           # (5, 4)
    b2 = head[R_B2:R_B2 + 1, 0:ACTION_DIM]                 # (1, 4)
    a = jnp.maximum(pre + b1, 0.0)                         # ReLU, (5, 1)
    out_ref[...] = b2 + jnp.sum(a * w2t, axis=0, keepdims=True)   # (1, 4)


def _fused_call(xcol, slab):
    return pl.pallas_call(
        fused_forward_kernel,
        out_shape=jax.ShapeDtypeStruct((1, ACTION_DIM), jnp.float32),
        grid=(1,),
        in_specs=[
            pl.BlockSpec((NPOS, NPATCH), lambda i: (0, 0)),                 # x im2col
            pl.BlockSpec((HIDDEN + 2, NPOS, NF), lambda i: (0, 0, 0)),      # param slab
        ],
        out_specs=pl.BlockSpec((1, ACTION_DIM), lambda i: (0, 0)),
        compiler_params=pltpu.CompilerParams(
            dimension_semantics=("arbitrary",),
            # Fold the tiny wrapper-side im2col fusion straight into operand 0
            # (no separate dispatch / HBM round trip for layout prep).
            allow_input_fusion=[True, False],
        ),
    )(xcol, slab)


def _im2col(x):
    """(1, CIN, S, S) NCHW -> (S*S, KS*KS*CIN) conv patch matrix (zero-padded)."""
    xp = jnp.pad(x.astype(jnp.float32)[0], ((0, 0), (0, 1), (0, 1)))   # (4, 9, 9)
    taps = [xp[:, ki:ki + S, kj:kj + S] for ki in range(KS) for kj in range(KS)]
    stk = jnp.stack(taps, axis=0)                                      # (T, C, S, S)
    return jnp.transpose(stk, (2, 3, 0, 1)).reshape(NPOS, NPATCH)      # (64, 16)


def prepare_params(params):
    """One-time repack of the PyTorch-shaped parameters into a single slab.

    Slab layout, shape (HIDDEN + 2, S*S, NF) float32:
      planes [0, HIDDEN): w1 permuted to the pooled (q=h*S+w, f) layout,
                          zeros on the h>=6 / w>=6 gap rows
      plane  HIDDEN:      rows 0:16 -> im2col conv weight (BN scale folded)
                          row  16   -> conv-bias + BN shift (per filter)
      plane  HIDDEN+1:    rows 0:5  col 0     -> b1
                          rows 8:13 cols 0:4  -> w2^T
                          row 16    cols 0:4  -> b2
    """
    w_conv, b_conv, gamma, beta, rmean, rvar, w1, b1, w2, b2 = params
    scale = gamma / jnp.sqrt(rvar + EPS)                               # (NF,)
    shift = (b_conv - rmean) * scale + beta                            # (NF,)
    # wcat[t*CIN + c, f] = w_conv[f, c, ki, kj] * scale[f],  t = ki*KS + kj
    wk = w_conv * scale[:, None, None, None]                           # (NF,CIN,KS,KS)
    wcat = jnp.transpose(wk, (2, 3, 1, 0)).reshape(NPATCH, NF)         # (16, 16)
    # w1k[i, h*S + w, f] = w1[i, f*HPOOL^2 + h*HPOOL + w]; zeros elsewhere
    w1_hwf = jnp.transpose(w1.reshape(HIDDEN, NF, HPOOL, HPOOL), (0, 2, 3, 1))
    w1_pad = jnp.pad(w1_hwf, ((0, 0), (0, S - HPOOL), (0, S - HPOOL), (0, 0)))
    w1k = w1_pad.reshape(HIDDEN, NPOS, NF)                             # (5, 64, 16)

    slab = jnp.zeros((HIDDEN + 2, NPOS, NF), jnp.float32)
    slab = slab.at[P_W1:P_W1 + HIDDEN].set(w1k.astype(jnp.float32))
    slab = slab.at[P_CONV, 0:NPATCH, :].set(wcat.astype(jnp.float32))
    slab = slab.at[P_CONV, R_SHIFT, :].set(shift.astype(jnp.float32))
    slab = slab.at[P_HEAD, R_B1:R_B1 + HIDDEN, 0].set(b1.astype(jnp.float32))
    slab = slab.at[P_HEAD, R_W2:R_W2 + HIDDEN, 0:ACTION_DIM].set(
        jnp.transpose(w2).astype(jnp.float32))
    slab = slab.at[P_HEAD, R_B2, 0:ACTION_DIM].set(b2.astype(jnp.float32))
    return slab


@jax.jit
def forward(x, slab):
    """Pallas forward. x: (1, CIN, S, S) float32 NCHW (batch must be 1)."""
    if x.shape != (1, CIN, S, S):
        raise ValueError(f"expected x of shape {(1, CIN, S, S)}, got {x.shape}")
    out = _fused_call(_im2col(x), slab)
    return out.reshape(ACTION_DIM)


def torch_reference(x, params):
    """Pure-JAX replica of the PyTorch eval-mode forward (NCHW), for checking."""
    w_conv, b_conv, gamma, beta, rmean, rvar, w1, b1, w2, b2 = params
    y = lax.conv_general_dilated(x, w_conv, (1, 1), 'VALID',
                                 dimension_numbers=('NCHW', 'OIHW', 'NCHW'))
    y = y + b_conv.reshape(1, NF, 1, 1)
    y = (y - rmean.reshape(1, NF, 1, 1)) / jnp.sqrt(rvar.reshape(1, NF, 1, 1) + EPS)
    y = y * gamma.reshape(1, NF, 1, 1) + beta.reshape(1, NF, 1, 1)
    y = jnp.where(y > 0, y, NEG_SLOPE * y)
    y = lax.reduce_window(y, -jnp.inf, lax.max, (1, 1, KS, KS), (1, 1, 1, 1), 'VALID')
    f = y.reshape(-1)
    h = jnp.maximum(f @ w1.T + b1, 0.0)
    return h @ w2.T + b2


if __name__ == "__main__":
    key = jax.random.PRNGKey(0)
    ks = jax.random.split(key, 11)
    LIN = NF * HPOOL * HPOOL   # 16 * 6 * 6 = 576

    # Deterministic synthetic parameters (PyTorch shapes).
    w_conv = 0.3 * jax.random.normal(ks[0], (NF, CIN, KS, KS), jnp.float32)
    b_conv = 0.1 * jax.random.normal(ks[1], (NF,), jnp.float32)
    gamma = 1.0 + 0.1 * jax.random.normal(ks[2], (NF,), jnp.float32)
    beta = 0.1 * jax.random.normal(ks[3], (NF,), jnp.float32)
    rmean = 0.1 * jax.random.normal(ks[4], (NF,), jnp.float32)
    rvar = 0.5 + jax.random.uniform(ks[5], (NF,), jnp.float32)
    w1 = 0.05 * jax.random.normal(ks[6], (HIDDEN, LIN), jnp.float32)
    b1 = 0.05 * jax.random.normal(ks[7], (HIDDEN,), jnp.float32)
    w2 = 0.3 * jax.random.normal(ks[8], (ACTION_DIM, HIDDEN), jnp.float32)
    b2 = 0.05 * jax.random.normal(ks[9], (ACTION_DIM,), jnp.float32)
    params = (w_conv, b_conv, gamma, beta, rmean, rvar, w1, b1, w2, b2)

    # Example input: batch=1 (the module flattens into the Linear, so N must be 1).
    x = jax.random.normal(ks[10], (1, CIN, S, S), jnp.float32)

    slab = prepare_params(params)               # one-time, host/XLA side
    out = jax.block_until_ready(forward(x, slab))
    ref = torch_reference(x, params)
    np.testing.assert_allclose(np.asarray(out), np.asarray(ref), rtol=1e-2, atol=1e-2)
    print("KERNEL_OK")
</pallas_src>

<mosaic_0001>
module attributes {stable_mosaic.version = 11 : i64} {
  func.func @fused_forward_kernel(%arg0: i32, %arg1: memref<64x16xf32, #tpu.memory_space<vmem>>, %arg2: memref<7x64x16xf32, #tpu.memory_space<vmem>>, %arg3: memref<1x4xf32, #tpu.memory_space<vmem>>) attributes {dimension_semantics = [#tpu.dimension_semantics<arbitrary>], iteration_bounds = array<i64: 1>, scalar_prefetch = 0 : i64, scratch_operands = 0 : i64, tpu.core_type = #tpu.core_type<tc>, window_params = [{pipeline_mode = #tpu.pipeline_mode<synchronous>, transform_indices = @transform_0, window_bounds = array<i64: 64, 16>}, {pipeline_mode = #tpu.pipeline_mode<synchronous>, transform_indices = @transform_1, window_bounds = array<i64: 7, 64, 16>}, {pipeline_mode = #tpu.pipeline_mode<synchronous>, transform_indices = @transform_2, window_bounds = array<i64: 1, 4>}]} {
    %c5 = arith.constant 5 : index
    %c0 = arith.constant 0 : index
    %c0_0 = arith.constant 0 : index
    %0 = vector.load %arg2[%c5, %c0, %c0_0] : memref<7x64x16xf32, #tpu.memory_space<vmem>>, vector<1x64x16xf32>
    %1 = vector.shape_cast %0 : vector<1x64x16xf32> to vector<64x16xf32>
    %2 = vector.extract_strided_slice %1 {offsets = [0, 0], sizes = [16, 16], strides = [1, 1]} : vector<64x16xf32> to vector<16x16xf32>
    %3 = vector.extract_strided_slice %1 {offsets = [16, 0], sizes = [1, 16], strides = [1, 1]} : vector<64x16xf32> to vector<1x16xf32>
    %c0_1 = arith.constant 0 : index
    %c0_2 = arith.constant 0 : index
    %4 = vector.load %arg1[%c0_1, %c0_2] : memref<64x16xf32, #tpu.memory_space<vmem>>, vector<64x16xf32>
    %cst = arith.constant dense<0.000000e+00> : vector<64x16xf32>
    %5 = tpu.matmul %4, %2, %cst {dimension_numbers = #tpu.dot_dimension_numbers<[1], [0], [0], [1], [0, 0, 1, 1], [], []>} : vector<64x16xf32>, vector<16x16xf32>, vector<64x16xf32> -> vector<64x16xf32>
    %6 = vector.broadcast %3 : vector<1x16xf32> to vector<64x16xf32>
    %7 = arith.addf %5, %6 : vector<64x16xf32>
    %cst_3 = arith.constant 0.000000e+00 : f32
    %8 = vector.broadcast %cst_3 : f32 to vector<64x16xf32>
    %9 = arith.cmpf ogt, %7, %8 : vector<64x16xf32>
    %cst_4 = arith.constant 0.00999999977 : f32
    %10 = vector.broadcast %cst_4 : f32 to vector<64x16xf32>
    %11 = arith.mulf %10, %7 : vector<64x16xf32>
    %12 = arith.select %9, %7, %11 : vector<64x16xi1>, vector<64x16xf32>
    %c63_i32 = arith.constant 63 : i32
    %13 = tpu.dynamic_rotate %12 by %c63_i32 dim 0 : vector<64x16xf32>, i32 -> vector<64x16xf32>
    %14 = arith.maximumf %12, %13 : vector<64x16xf32>
    %c56_i32 = arith.constant 56 : i32
    %15 = tpu.dynamic_rotate %14 by %c56_i32 dim 0 : vector<64x16xf32>, i32 -> vector<64x16xf32>
    %16 = arith.maximumf %14, %15 : vector<64x16xf32>
    %c0_5 = arith.constant 0 : index
    %c0_6 = arith.constant 0 : index
    %c0_7 = arith.constant 0 : index
    %17 = vector.load %arg2[%c0_5, %c0_6, %c0_7] : memref<7x64x16xf32, #tpu.memory_space<vmem>>, vector<1x64x16xf32>
    %18 = vector.shape_cast %17 : vector<1x64x16xf32> to vector<64x16xf32>
    %19 = arith.mulf %16, %18 : vector<64x16xf32>
    %cst_8 = arith.constant dense<0.000000e+00> : vector<16xf32>
    %20 = vector.multi_reduction <add>, %19, %cst_8 [0] : vector<64x16xf32> to vector<16xf32>
    %21 = vector.shape_cast %20 : vector<16xf32> to vector<1x16xf32>
    %c1 = arith.constant 1 : index
    %c0_9 = arith.constant 0 : index
    %c0_10 = arith.constant 0 : index
    %22 = vector.load %arg2[%c1, %c0_9, %c0_10] : memref<7x64x16xf32, #tpu.memory_space<vmem>>, vector<1x64x16xf32>
    %23 = vector.shape_cast %22 : vector<1x64x16xf32> to vector<64x16xf32>
    %24 = arith.mulf %16, %23 : vector<64x16xf32>
    %cst_11 = arith.constant dense<0.000000e+00> : vector<16xf32>
    %25 = vector.multi_reduction <add>, %24, %cst_11 [0] : vector<64x16xf32> to vector<16xf32>
    %26 = vector.shape_cast %25 : vector<16xf32> to vector<1x16xf32>
    %c2 = arith.constant 2 : index
    %c0_12 = arith.constant 0 : index
    %c0_13 = arith.constant 0 : index
    %27 = vector.load %arg2[%c2, %c0_12, %c0_13] : memref<7x64x16xf32, #tpu.memory_space<vmem>>, vector<1x64x16xf32>
    %28 = vector.shape_cast %27 : vector<1x64x16xf32> to vector<64x16xf32>
    %29 = arith.mulf %16, %28 : vector<64x16xf32>
    %cst_14 = arith.constant dense<0.000000e+00> : vector<16xf32>
    %30 = vector.multi_reduction <add>, %29, %cst_14 [0] : vector<64x16xf32> to vector<16xf32>
    %31 = vector.shape_cast %30 : vector<16xf32> to vector<1x16xf32>
    %c3 = arith.constant 3 : index
    %c0_15 = arith.constant 0 : index
    %c0_16 = arith.constant 0 : index
    %32 = vector.load %arg2[%c3, %c0_15, %c0_16] : memref<7x64x16xf32, #tpu.memory_space<vmem>>, vector<1x64x16xf32>
    %33 = vector.shape_cast %32 : vector<1x64x16xf32> to vector<64x16xf32>
    %34 = arith.mulf %16, %33 : vector<64x16xf32>
    %cst_17 = arith.constant dense<0.000000e+00> : vector<16xf32>
    %35 = vector.multi_reduction <add>, %34, %cst_17 [0] : vector<64x16xf32> to vector<16xf32>
    %36 = vector.shape_cast %35 : vector<16xf32> to vector<1x16xf32>
    %c4 = arith.constant 4 : index
    %c0_18 = arith.constant 0 : index
    %c0_19 = arith.constant 0 : index
    %37 = vector.load %arg2[%c4, %c0_18, %c0_19] : memref<7x64x16xf32, #tpu.memory_space<vmem>>, vector<1x64x16xf32>
    %38 = vector.shape_cast %37 : vector<1x64x16xf32> to vector<64x16xf32>
    %39 = arith.mulf %16, %38 : vector<64x16xf32>
    %cst_20 = arith.constant dense<0.000000e+00> : vector<16xf32>
    %40 = vector.multi_reduction <add>, %39, %cst_20 [0] : vector<64x16xf32> to vector<16xf32>
    %41 = vector.shape_cast %40 : vector<16xf32> to vector<1x16xf32>
    %42 = tpu.concatenate %21, %26, %31, %36, %41 in 0 : vector<1x16xf32>, vector<1x16xf32>, vector<1x16xf32>, vector<1x16xf32>, vector<1x16xf32> -> vector<5x16xf32>
    %cst_21 = arith.constant dense<0.000000e+00> : vector<5xf32>
    %43 = vector.multi_reduction <add>, %42, %cst_21 [1] : vector<5x16xf32> to vector<5xf32>
    %44 = vector.shape_cast %43 : vector<5xf32> to vector<5x1xf32>
    %c6 = arith.constant 6 : index
    %c0_22 = arith.constant 0 : index
    %c0_23 = arith.constant 0 : index
    %45 = vector.load %arg2[%c6, %c0_22, %c0_23] : memref<7x64x16xf32, #tpu.memory_space<vmem>>, vector<1x64x16xf32>
    %46 = vector.shape_cast %45 : vector<1x64x16xf32> to vector<64x16xf32>
    %47 = vector.extract_strided_slice %46 {offsets = [0, 0], sizes = [5, 1], strides = [1, 1]} : vector<64x16xf32> to vector<5x1xf32>
    %48 = vector.extract_strided_slice %46 {offsets = [8, 0], sizes = [5, 4], strides = [1, 1]} : vector<64x16xf32> to vector<5x4xf32>
    %49 = vector.extract_strided_slice %46 {offsets = [16, 0], sizes = [1, 4], strides = [1, 1]} : vector<64x16xf32> to vector<1x4xf32>
    %50 = arith.addf %44, %47 : vector<5x1xf32>
    %cst_24 = arith.constant 0.000000e+00 : f32
    %51 = vector.broadcast %cst_24 : f32 to vector<5x1xf32>
    %52 = arith.maximumf %50, %51 : vector<5x1xf32>
    %53 = vector.broadcast %52 : vector<5x1xf32> to vector<5x4xf32>
    %54 = arith.mulf %53, %48 : vector<5x4xf32>
    %cst_25 = arith.constant dense<0.000000e+00> : vector<4xf32>
    %55 = vector.multi_reduction <add>, %54, %cst_25 [0] : vector<5x4xf32> to vector<4xf32>
    %56 = vector.shape_cast %55 : vector<4xf32> to vector<1x4xf32>
    %57 = arith.addf %49, %56 : vector<1x4xf32>
    %c0_26 = arith.constant 0 : index
    %c0_27 = arith.constant 0 : index
    %58 = vector.load %arg3[%c0_26, %c0_27] : memref<1x4xf32, #tpu.memory_space<vmem>>, vector<1x4xf32>
    tpu.vector_store %arg3[%c0_26, %c0_27], %57 {strides = array<i32>} : memref<1x4xf32, #tpu.memory_space<vmem>>, vector<1x4xf32>,
    return
  }
  func.func @transform_0(%arg0: i32) -> (i32, i32) {
    %c0_i32 = arith.constant 0 : i32
    %c0_i32_0 = arith.constant 0 : i32
    %c0_i32_1 = arith.constant 0 : i32
    return %c0_i32, %c0_i32_0 : i32, i32
  }
  func.func @transform_1(%arg0: i32) -> (i32, i32, i32) {
    %c0_i32 = arith.constant 0 : i32
    %c0_i32_0 = arith.constant 0 : i32
    %c0_i32_1 = arith.constant 0 : i32
    %c0_i32_2 = arith.constant 0 : i32
    return %c0_i32, %c0_i32_0, %c0_i32_1 : i32, i32, i32
  }
  func.func @transform_2(%arg0: i32) -> (i32, i32) {
    %c0_i32 = arith.constant 0 : i32
    %c0_i32_0 = arith.constant 0 : i32
    %c0_i32_1 = arith.constant 0 : i32
    return %c0_i32, %c0_i32_0 : i32, i32
  }
}

</mosaic_0001>

<llo_original>
// kernel: forward.1
$region0: #{forward.1}
  #allocation0 [shape = 'u32[]', space=smem, size = 0x4, offset = 0x4, fixed_abs, tag = 'smem constant byte address 0x4 - core index']
  #allocation1 [shape = 'u32[144,128]{1,0:T(1,128)}', space=vmem, size = 0x12000, scoped, tag = 'internal scratch']
  %s0 = inlined_call_operand.vmem [shape: f32[64,16], index: 0, kind: input, shape index: {}]
  %s1 = inlined_call_operand.vmem [shape: f32[7,64,16], index: 1, kind: input, shape index: {}]
  %s2 = inlined_call_operand.hbm [shape: f32[1,4], index: 2, kind: output, shape index: {}]
  %s3 = sld [smem:[#allocation0]]
  $region18: #{forward.1} parent=0
    _
  %s5 = ssub.s32 1, %s3
  %s6 = scalar_select 0, %s5, %s3
  $region1: #{forward.1} parent=0
    #allocation2 [shape = 'u8[512]{0}', space=vmem, size = 0x400, scoped, tag = 'output window, operand 0, single buffered']
    #allocation3 [shape = 's32[1]{0}', space=sflag, size = 0x4, scoped, tag = 'scoped memory for forward.1']
    %7 = vsyncpa [#allocation3], 0
    // Predicated region
    $region2: #{forward.1} parent=1 // pred_check
      _
    $region3: #{forward.1} parent=1 // pred_check_branch
      %9 = sbr.rel (0) target = $region5
    $region4: #{forward.1} parent=1 // pred_region
      _
    $region5: #{forward.1} parent=1 // pred_fallthru
      _
    // Predicated region
    $region6: #{forward.1} parent=1 // pred_check
      _
    $region7: #{forward.1} parent=1 // pred_check_branch
      %11 = sbr.rel (0) target = $region9
    $region8: #{forward.1} parent=1 // pred_region
      _
    $region9: #{forward.1} parent=1 // pred_fallthru
      _
    %s12 = scalar_lea.vmem %s1, 320
    %v13 = vld [vmem:[%s12] sm:$0xff]
    %v14 = vld [vmem:[%s12 + $0x8] sm:$0xff]
    %v15 = vld [vmem:[%s12 + $0x10] sm:$0xff]
    %v16 = vld [vmem:[%s0] sm:$0xff]
    %v17 = vld [vmem:[%s0 + $0x8] sm:$0xff]
    %v18 = vld [vmem:[%s0 + $0x10] sm:$0xff]
    %v19 = vld [vmem:[%s0 + $0x18] sm:$0xff]
    %v20 = vld [vmem:[%s0 + $0x20] sm:$0xff]
    %v21 = vld [vmem:[%s0 + $0x28] sm:$0xff]
    %v22 = vld [vmem:[%s0 + $0x30] sm:$0xff]
    %v23 = vld [vmem:[%s0 + $0x38] sm:$0xff]
    %v24 = vlaneseq
    %v25 = vshrl.u32 %v24, 7
    %v26 = vsub.s32 0, %v25
    %v27 = vrot.slane %v15, %v26
    %vm28 = vcmask 130048
    %v30 = vsel %vm28, %v16, 0
    %v33 = vsel %vm28, %v17, 0
    %v36 = vsel %vm28, %v18, 0
    %v39 = vsel %vm28, %v19, 0
    %v42 = vsel %vm28, %v20, 0
    %v45 = vsel %vm28, %v21, 0
    %v48 = vsel %vm28, %v22, 0
    %v51 = vsel %vm28, %v23, 0
    %53 = vmatprep.subr.mxu0 0.0
    %54 = vmatpush1.msra.mxu0 %v13
    %55 = vmatprep.subr.mxu0 0.0
    %56 = vmatpush1.msra.mxu0 %v14
    %57 = vmatprep.subr.mxu0 0.0
    %58 = vmatpush1.msra.mxu0 0.0
    %59 = vmatprep.subr.mxu0 0.0
    %60 = vmatpush1.msra.mxu0 0.0
    %61 = vmatprep.subr.mxu0 0.0
    %62 = vmatpush1.msra.mxu0 0.0
    %63 = vmatprep.subr.mxu0 0.0
    %64 = vmatpush1.msra.mxu0 0.0
    %65 = vmatprep.subr.mxu0 0.0
    %66 = vmatpush1.msra.mxu0 0.0
    %67 = vmatprep.subr.mxu0 0.0
    %68 = vmatpush1.msra.mxu0 0.0
    %69 = vmatprep.subr.mxu0 0.0
    %70 = vmatpush1.msra.mxu0 0.0
    %71 = vmatprep.subr.mxu0 0.0
    %72 = vmatpush1.msra.mxu0 0.0
    %73 = vmatprep.subr.mxu0 0.0
    %74 = vmatpush1.msra.mxu0 0.0
    %75 = vmatprep.subr.mxu0 0.0
    %76 = vmatpush1.msra.mxu0 0.0
    %77 = vmatprep.subr.mxu0 0.0
    %78 = vmatpush1.msra.mxu0 0.0
    %79 = vmatprep.subr.mxu0 0.0
    %80 = vmatpush1.msra.mxu0 0.0
    %81 = vmatprep.subr.mxu0 0.0
    %82 = vmatpush1.msra.mxu0 0.0
    %83 = vmatprep.subr.mxu0 0.0
    %84 = vmatpush1.msra.mxu0 0.0
    %85 = vmatprep.subr.mxu0 0.0
    %86 = vmatpush1.msra.mxu0 0.0
    %87 = vmatprep.subr.mxu0 0.0
    %88 = vmatpush1.msra.mxu0 0.0
    %89 = vmatprep.subr.mxu0 0.0
    %90 = vmatpush1.msra.mxu0 0.0
    %91 = vmatprep.subr.mxu0 0.0
    %92 = vmatpush1.msra.mxu0 0.0
    %93 = vmatprep.subr.mxu0 0.0
    %94 = vmatpush1.msra.mxu0 0.0
    %95 = vmatprep.subr.mxu0 0.0
    %96 = vmatpush1.msra.mxu0 0.0
    %97 = vmatprep.subr.mxu0 0.0
    %98 = vmatpush1.msra.mxu0 0.0
    %99 = vmatprep.subr.mxu0 0.0
    %100 = vmatpush1.msra.mxu0 0.0
    %101 = vmatprep.subr.mxu0 0.0
    %102 = vmatpush1.msra.mxu0 0.0
    %103 = vmatprep.subr.mxu0 0.0
    %104 = vmatpush1.msra.mxu0 0.0
    %105 = vmatprep.subr.mxu0 0.0
    %106 = vmatpush1.msra.mxu0 0.0
    %107 = vmatprep.subr.mxu0 0.0
    %108 = vmatpush1.msra.mxu0 0.0
    %109 = vmatprep.subr.mxu0 0.0
    %110 = vmatpush1.msra.mxu0 0.0
    %111 = vmatprep.subr.mxu0 0.0
    %112 = vmatpush1.msra.mxu0 0.0
    %113 = vmatprep.subr.mxu0 0.0
    %114 = vmatpush1.msra.mxu0 0.0
    %115 = vmatprep.subr.mxu0 0.0
    %116 = vmatpush1.msra.mxu0 0.0
    %117 = vmatprep.mubr.f32.mxu0 0.0
    %118 = vmatmul.mubr.f32.gmra.mrb[0].mxu0 %v30
    %v119 = vpop.f32.mrb[0].mxu0
    %v120 = vadd.f32 %v27, %v119
    %v121 = vpop.f32.mrb[0].mxu0
    %122 = vmatprep.mubr.f32.mxu0 0.0
    %123 = vmatmul.mubr.f32.gmra.mrb[0].mxu0 %v33
    %v124 = vpop.f32.mrb[0].mxu0
    %v125 = vadd.f32 %v27, %v124
    %v126 = vpop.f32.mrb[0].mxu0
    %127 = vmatprep.mubr.f32.mxu0 0.0
    %128 = vmatmul.mubr.f32.gmra.mrb[0].mxu0 %v36
    %v129 = vpop.f32.mrb[0].mxu0
    %v130 = vadd.f32 %v27, %v129
    %v131 = vpop.f32.mrb[0].mxu0
    %132 = vmatprep.mubr.f32.mxu0 0.0
    %133 = vmatmul.mubr.f32.gmra.mrb[0].mxu0 %v39
    %v134 = vpop.f32.mrb[0].mxu0
    %v135 = vadd.f32 %v27, %v134
    %v136 = vpop.f32.mrb[0].mxu0
    %137 = vmatprep.mubr.f32.mxu0 0.0
    %138 = vmatmul.mubr.f32.gmra.mrb[0].mxu0 %v42
    %v139 = vpop.f32.mrb[0].mxu0
    %v140 = vadd.f32 %v27, %v139
    %v141 = vpop.f32.mrb[0].mxu0
    %142 = vmatprep.mubr.f32.mxu0 0.0
    %143 = vmatmul.mubr.f32.gmra.mrb[0].mxu0 %v45
    %v144 = vpop.f32.mrb[0].mxu0
    %v145 = vadd.f32 %v27, %v144
    %v146 = vpop.f32.mrb[0].mxu0
    %147 = vmatprep.mubr.f32.mxu0 0.0
    %148 = vmatmul.mubr.f32.gmra.mrb[0].mxu0 %v48
    %v149 = vpop.f32.mrb[0].mxu0
    %v150 = vadd.f32 %v27, %v149
    %v151 = vpop.f32.mrb[0].mxu0
    %152 = vmatprep.mubr.f32.mxu0 0.0
    %153 = vmatmul.mubr.f32.gmra.mrb[0].mxu0 %v51
    %v154 = vpop.f32.mrb[0].mxu0
    %v155 = vadd.f32 %v27, %v154
    %v156 = vpop.f32.mrb[0].mxu0
    %157 = vdwg.mxu0
    %vm158 = vcmp.gt.f32.partialorder %v120, 0.0
    %vm159 = vcmp.gt.f32.partialorder %v125, 0.0
    %vm160 = vcmp.gt.f32.partialorder %v130, 0.0
    %vm161 = vcmp.gt.f32.partialorder %v135, 0.0
    %vm162 = vcmp.gt.f32.partialorder %v140, 0.0
    %vm163 = vcmp.gt.f32.partialorder %v145, 0.0
    %vm164 = vcmp.gt.f32.partialorder %v150, 0.0
    %vm165 = vcmp.gt.f32.partialorder %v155, 0.0
    %v166 = vmul.f32 %v120, 0.01
    %v167 = vmul.f32 %v125, 0.01
    %v168 = vmul.f32 %v130, 0.01
    %v169 = vmul.f32 %v135, 0.01
    %v170 = vmul.f32 %v140, 0.01
    %v171 = vmul.f32 %v145, 0.01
    %v172 = vmul.f32 %v150, 0.01
    %v173 = vmul.f32 %v155, 0.01
    %v174 = vsel %vm158, %v120, %v166
    %v175 = vsel %vm159, %v125, %v167
    %v176 = vsel %vm160, %v130, %v168
    %v177 = vsel %vm161, %v135, %v169
    %v178 = vsel %vm162, %v140, %v170
    %v179 = vsel %vm163, %v145, %v171
    %v180 = vsel %vm164, %v150, %v172
    %v181 = vsel %vm165, %v155, %v173
    %v182 = vrot.slane %v174, 1
    %v183 = vrot.slane %v175, 1
    %v184 = vrot.slane %v176, 1
    %v185 = vrot.slane %v177, 1
    %v186 = vrot.slane %v178, 1
    %v187 = vrot.slane %v179, 1
    %v188 = vrot.slane %v180, 1
    %v189 = vrot.slane %v181, 1
    %v190 = vlaneseq
    %v191 = vshrl.u32 %v190, 7
    %vm192 = vcmp.lt.s32.totalorder %v191, 7
    %v193 = vsel %vm192, %v188, %v189
    %v194 = vsel %vm192, %v187, %v188
    %v195 = vsel %vm192, %v186, %v187
    %v196 = vsel %vm192, %v185, %v186
    %v197 = vsel %vm192, %v184, %v185
    %v198 = vsel %vm192, %v183, %v184
    %v199 = vsel %vm192, %v182, %v183
    %v200 = vsel %vm192, %v189, %v182
    %v201 = vmax.f32 %v174, %v199
    %v202 = vmax.f32 %v175, %v198
    %v203 = vmax.f32 %v176, %v197
    %v204 = vmax.f32 %v177, %v196
    %v205 = vmax.f32 %v178, %v195
    %v206 = vmax.f32 %v179, %v194
    %v207 = vmax.f32 %v180, %v193
    %v208 = vmax.f32 %v181, %v200
    %v209 = vmax.f32 %v201, %v202
    %v210 = vmax.f32 %v202, %v203
    %v211 = vmax.f32 %v203, %v204
    %v212 = vmax.f32 %v204, %v205
    %v213 = vmax.f32 %v205, %v206
    %v214 = vmax.f32 %v206, %v207
    %v215 = vmax.f32 %v207, %v208
    %v216 = vmax.f32 %v208, %v201
    %v217 = vld [vmem:[%s1] sm:$0xff]
    %v218 = vld [vmem:[%s1 + $0x8] sm:$0xff]
    %v219 = vld [vmem:[%s1 + $0x10] sm:$0xff]
    %v220 = vld [vmem:[%s1 + $0x18] sm:$0xff]
    %v221 = vld [vmem:[%s1 + $0x20] sm:$0xff]
    %v222 = vld [vmem:[%s1 + $0x28] sm:$0xff]
    %v223 = vld [vmem:[%s1 + $0x30] sm:$0xff]
    %v224 = vld [vmem:[%s1 + $0x38] sm:$0xff]
    %v225 = vmul.f32 %v209, %v217
    %v226 = vmul.f32 %v210, %v218
    %v227 = vmul.f32 %v211, %v219
    %v228 = vmul.f32 %v212, %v220
    %v229 = vmul.f32 %v213, %v221
    %v230 = vmul.f32 %v214, %v222
    %v231 = vmul.f32 %v215, %v223
    %v232 = vmul.f32 %v216, %v224
    %v233 = vsel %vm28, %v225, 0.0
    %v234 = vsel %vm28, %v226, 0.0
    %v235 = vadd.f32 %v233, %v234
    %v236 = vsel %vm28, %v227, 0.0
    %v237 = vadd.f32 %v235, %v236
    %v238 = vsel %vm28, %v228, 0.0
    %v239 = vadd.f32 %v237, %v238
    %v240 = vsel %vm28, %v229, 0.0
    %v241 = vadd.f32 %v239, %v240
    %v242 = vsel %vm28, %v230, 0.0
    %v243 = vadd.f32 %v241, %v242
    %v244 = vsel %vm28, %v231, 0.0
    %v245 = vadd.f32 %v243, %v244
    %v246 = vsel %vm28, %v232, 0.0
    %v247 = vadd.f32 %v245, %v246
    %v248 = vrot.slane %v247, 4
    %v249 = vadd.f32 %v247, %v248
    %v250 = vrot.slane %v249, 2
    %v251 = vadd.f32 %v249, %v250
    %v252 = vrot.slane %v251, 1
    %v253 = vadd.f32 %v251, %v252
    %s254 = scalar_lea.vmem %s1, 64
    %v255 = vld [vmem:[%s254] sm:$0xff]
    %v256 = vld [vmem:[%s254 + $0x8] sm:$0xff]
    %v257 = vld [vmem:[%s254 + $0x10] sm:$0xff]
    %v258 = vld [vmem:[%s254 + $0x18] sm:$0xff]
    %v259 = vld [vmem:[%s254 + $0x20] sm:$0xff]
    %v260 = vld [vmem:[%s254 + $0x28] sm:$0xff]
    %v261 = vld [vmem:[%s254 + $0x30] sm:$0xff]
    %v262 = vld [vmem:[%s254 + $0x38] sm:$0xff]
    %v263 = vmul.f32 %v209, %v255
    %v264 = vmul.f32 %v210, %v256
    %v265 = vmul.f32 %v211, %v257
    %v266 = vmul.f32 %v212, %v258
    %v267 = vmul.f32 %v213, %v259
    %v268 = vmul.f32 %v214, %v260
    %v269 = vmul.f32 %v215, %v261
    %v270 = vmul.f32 %v216, %v262
    %v271 = vsel %vm28, %v263, 0.0
    %v272 = vsel %vm28, %v264, 0.0
    %v273 = vadd.f32 %v271, %v272
    %v274 = vsel %vm28, %v265, 0.0
    %v275 = vadd.f32 %v273, %v274
    %v276 = vsel %vm28, %v266, 0.0
    %v277 = vadd.f32 %v275, %v276
    %v278 = vsel %vm28, %v267, 0.0
    %v279 = vadd.f32 %v277, %v278
    %v280 = vsel %vm28, %v268, 0.0
    %v281 = vadd.f32 %v279, %v280
    %v282 = vsel %vm28, %v269, 0.0
    %v283 = vadd.f32 %v281, %v282
    %v284 = vsel %vm28, %v270, 0.0
    %v285 = vadd.f32 %v283, %v284
    %v286 = vrot.slane %v285, 4
    %v287 = vadd.f32 %v285, %v286
    %v288 = vrot.slane %v287, 2
    %v289 = vadd.f32 %v287, %v288
    %v290 = vrot.slane %v289, 1
    %v291 = vadd.f32 %v289, %v290
    %s292 = scalar_lea.vmem %s1, 128
    %v293 = vld [vmem:[%s292] sm:$0xff]
    %v294 = vld [vmem:[%s292 + $0x8] sm:$0xff]
    %v295 = vld [vmem:[%s292 + $0x10] sm:$0xff]
    %v296 = vld [vmem:[%s292 + $0x18] sm:$0xff]
    %v297 = vld [vmem:[%s292 + $0x20] sm:$0xff]
    %v298 = vld [vmem:[%s292 + $0x28] sm:$0xff]
    %v299 = vld [vmem:[%s292 + $0x30] sm:$0xff]
    %v300 = vld [vmem:[%s292 + $0x38] sm:$0xff]
    %v301 = vmul.f32 %v209, %v293
    %v302 = vmul.f32 %v210, %v294
    %v303 = vmul.f32 %v211, %v295
    %v304 = vmul.f32 %v212, %v296
    %v305 = vmul.f32 %v213, %v297
    %v306 = vmul.f32 %v214, %v298
    %v307 = vmul.f32 %v215, %v299
    %v308 = vmul.f32 %v216, %v300
    %v309 = vsel %vm28, %v301, 0.0
    %v310 = vsel %vm28, %v302, 0.0
    %v311 = vadd.f32 %v309, %v310
    %v312 = vsel %vm28, %v303, 0.0
    %v313 = vadd.f32 %v311, %v312
    %v314 = vsel %vm28, %v304, 0.0
    %v315 = vadd.f32 %v313, %v314
    %v316 = vsel %vm28, %v305, 0.0
    %v317 = vadd.f32 %v315, %v316
    %v318 = vsel %vm28, %v306, 0.0
    %v319 = vadd.f32 %v317, %v318
    %v320 = vsel %vm28, %v307, 0.0
    %v321 = vadd.f32 %v319, %v320
    %v322 = vsel %vm28, %v308, 0.0
    %v323 = vadd.f32 %v321, %v322
    %v324 = vrot.slane %v323, 4
    %v325 = vadd.f32 %v323, %v324
    %v326 = vrot.slane %v325, 2
    %v327 = vadd.f32 %v325, %v326
    %v328 = vrot.slane %v327, 1
    %v329 = vadd.f32 %v327, %v328
    %s330 = scalar_lea.vmem %s1, 192
    %v331 = vld [vmem:[%s330] sm:$0xff]
    %v332 = vld [vmem:[%s330 + $0x8] sm:$0xff]
    %v333 = vld [vmem:[%s330 + $0x10] sm:$0xff]
    %v334 = vld [vmem:[%s330 + $0x18] sm:$0xff]
    %v335 = vld [vmem:[%s330 + $0x20] sm:$0xff]
    %v336 = vld [vmem:[%s330 + $0x28] sm:$0xff]
    %v337 = vld [vmem:[%s330 + $0x30] sm:$0xff]
    %v338 = vld [vmem:[%s330 + $0x38] sm:$0xff]
    %v339 = vmul.f32 %v209, %v331
    %v340 = vmul.f32 %v210, %v332
    %v341 = vmul.f32 %v211, %v333
    %v342 = vmul.f32 %v212, %v334
    %v343 = vmul.f32 %v213, %v335
    %v344 = vmul.f32 %v214, %v336
    %v345 = vmul.f32 %v215, %v337
    %v346 = vmul.f32 %v216, %v338
    %v347 = vsel %vm28, %v339, 0.0
    %v348 = vsel %vm28, %v340, 0.0
    %v349 = vadd.f32 %v347, %v348
    %v350 = vsel %vm28, %v341, 0.0
    %v351 = vadd.f32 %v349, %v350
    %v352 = vsel %vm28, %v342, 0.0
    %v353 = vadd.f32 %v351, %v352
    %v354 = vsel %vm28, %v343, 0.0
    %v355 = vadd.f32 %v353, %v354
    %v356 = vsel %vm28, %v344, 0.0
    %v357 = vadd.f32 %v355, %v356
    %v358 = vsel %vm28, %v345, 0.0
    %v359 = vadd.f32 %v357, %v358
    %v360 = vsel %vm28, %v346, 0.0
    %v361 = vadd.f32 %v359, %v360
    %v362 = vrot.slane %v361, 4
    %v363 = vadd.f32 %v361, %v362
    %v364 = vrot.slane %v363, 2
    %v365 = vadd.f32 %v363, %v364
    %v366 = vrot.slane %v365, 1
    %v367 = vadd.f32 %v365, %v366
    %s368 = scalar_lea.vmem %s1, 256
    %v369 = vld [vmem:[%s368] sm:$0xff]
    %v370 = vld [vmem:[%s368 + $0x8] sm:$0xff]
    %v371 = vld [vmem:[%s368 + $0x10] sm:$0xff]
    %v372 = vld [vmem:[%s368 + $0x18] sm:$0xff]
    %v373 = vld [vmem:[%s368 + $0x20] sm:$0xff]
    %v374 = vld [vmem:[%s368 + $0x28] sm:$0xff]
    %v375 = vld [vmem:[%s368 + $0x30] sm:$0xff]
    %v376 = vld [vmem:[%s368 + $0x38] sm:$0xff]
    %v377 = vmul.f32 %v209, %v369
    %v378 = vmul.f32 %v210, %v370
    %v379 = vmul.f32 %v211, %v371
    %v380 = vmul.f32 %v212, %v372
    %v381 = vmul.f32 %v213, %v373
    %v382 = vmul.f32 %v214, %v374
    %v383 = vmul.f32 %v215, %v375
    %v384 = vmul.f32 %v216, %v376
    %v385 = vsel %vm28, %v377, 0.0
    %v386 = vsel %vm28, %v378, 0.0
    %v387 = vadd.f32 %v385, %v386
    %v388 = vsel %vm28, %v379, 0.0
    %v389 = vadd.f32 %v387, %v388
    %v390 = vsel %vm28, %v380, 0.0
    %v391 = vadd.f32 %v389, %v390
    %v392 = vsel %vm28, %v381, 0.0
    %v393 = vadd.f32 %v391, %v392
    %v394 = vsel %vm28, %v382, 0.0
    %v395 = vadd.f32 %v393, %v394
    %v396 = vsel %vm28, %v383, 0.0
    %v397 = vadd.f32 %v395, %v396
    %v398 = vsel %vm28, %v384, 0.0
    %v399 = vadd.f32 %v397, %v398
    %v400 = vrot.slane %v399, 4
    %v401 = vadd.f32 %v399, %v400
    %v402 = vrot.slane %v401, 2
    %v403 = vadd.f32 %v401, %v402
    %v404 = vrot.slane %v403, 1
    %v405 = vadd.f32 %v403, %v404
    %vm406 = vcmask 1040384
    %v407 = vsel %vm406, %v253, %v291
    %vm408 = vcmask 1041408
    %v409 = vsel %vm408, %v407, %v329
    %vm410 = vcmask 1042432
    %v411 = vsel %vm410, %v409, %v367
    %vm412 = vcmask 1043456
    %v413 = vsel %vm412, %v411, %v405
    %vm414 = vcmask 126976
    %v415 = vsel %vm414, %v413, 0.0
    %416 = vadd.xlane.f32.xlu0 %v415
    %v417 = vpop.xlane.xlu0 %416
    %s418 = scalar_lea.vmem %s1, 384
    %v419 = vld [vmem:[%s418] sm:$0xff]
    %v420 = vld [vmem:[%s418 + $0x8] sm:$0xff]
    %v421 = vld [vmem:[%s418 + $0x10] sm:$0xff]
    %v422 = vadd.f32 %v417, %v419
    %v423 = vmax.f32 %v422, 0.0
    %425 = vset.pattern.permute.xlu0 0
    %426 = vperm.xlu0 %425, %v423
    %v427 = vpop.permute.xlu0 %426
    %v429 = vmul.f32 %v427, %v420
    %vm430 = vcmask 28672
    %v431 = vsel %vm430, %v429, 0.0
    %v432 = vrot.slane %v431, 4
    %v433 = vadd.f32 %v431, %v432
    %v434 = vrot.slane %v433, 2
    %v435 = vadd.f32 %v433, %v434
    %v436 = vrot.slane %v435, 1
    %v437 = vadd.f32 %v435, %v436
    %v438 = vadd.f32 %v421, %v437
    %vm439 = vcmask 24576
    %440 = vst.msk [vmem:[#allocation2] sm:$0x1] %vm439, %v438
    // Predicated region
    $region10: #{forward.1} parent=1 // pred_check
      _
    $region11: #{forward.1} parent=1 // pred_check_branch
      %442 = sbr.rel (0) target = $region13
    $region12: #{forward.1} parent=1 // pred_region
      %s444 = ssub.s32 16, 16
      %445 = vsyncadd [#allocation3], %s444
      %s447 = sshll.u32 [#allocation2], 4
      %s448 = int_to_ptr.vmem [resolvable:$true] %s447
      %450 = dma.vmem_to_hbm [thread:$0]  %s448, 16, %s2, [#allocation3]
    $region13: #{forward.1} parent=1 // pred_fallthru
      _
    // Predicated region
    $region14: #{forward.1} parent=1 // pred_check
      _
    $region15: #{forward.1} parent=1 // pred_check_branch
      %452 = sbr.rel (0) target = $region17
    $region16: #{forward.1} parent=1 // pred_region
      %453 = dma.done [#allocation3], 16
    $region17: #{forward.1} parent=1 // pred_fallthru
      _
    %454 = vsyncpa [#allocation3], 1

</llo_original>
